<compile_context>
chip_gen: v7x
topology: tpu7x:2x2x1
jax: 0.10.0
libtpu: 0.0.40
codegen_flags: <defaults>
</compile_context>

<pallas_src>
import jax
import jax.numpy as jnp
from jax.experimental import pallas as pl
from jax.experimental.pallas import tpu as pltpu


_LANE = 128                              # vreg lane width (last dim)
_SUBLANE_32B = 8                         # sublanes per vreg for 32-bit dtypes
_MAX_BLOCK_BYTES = 4 * 1024 * 1024       # per block; real footprint = 4x (dbl-buffered in+out)
_VMEM_LIMIT_BYTES = 32 * 1024 * 1024     # safe on v5e/v6e (128 MiB) and v7x (64 MiB physical)


def _copy_kernel(x_ref, o_ref):
    # Pure DMA-bound identity copy of a lane-dense 2-D tile.
    # TODO(synk): in a real SSHead, fuse the downstream Linear here so the HBM
    # read feeds the MXU instead of being written straight back.
    o_ref[...] = x_ref[...]


def _sublane_multiple(itemsize: int) -> int:
    # 8 for 4-byte, 16 for bf16/f16, 32 for int8/fp8 (sub-32-bit packs sublanes).
    return _SUBLANE_32B * max(1, 4 // max(1, itemsize))


def _choose_slab(total: int, itemsize: int, sub: int):
    """Pick a dense (rows, c) slab view of the flat buffer plus a row tile tb.

    c : largest multiple of 128 dividing `total` such that a `sub`-row block
        still fits the per-block byte budget (so tb can be >= sub).
    tb: multiple of `sub` bounded by the block budget (or all rows if fewer).
    """
    max_c = max(_LANE, (_MAX_BLOCK_BYTES // (sub * itemsize)) // _LANE * _LANE)
    c = _LANE
    for cand in range(min(max_c, total), _LANE - 1, -_LANE):
        if total % cand == 0:
            c = cand
            break
    rows = total // c

    if rows >= sub:
        max_tb = max(sub, _MAX_BLOCK_BYTES // (c * itemsize))
        tb = max(sub, min(rows // sub, max_tb // sub) * sub)
    else:
        tb = rows                                   # full dim -> legal block shape

    # Expose >= 2 grid steps when possible (v7x has 2 TensorCores per chip).
    if tb >= rows and rows >= 2 * sub:
        half = (rows + 1) // 2
        tb = ((half + sub - 1) // sub) * sub
    return rows, c, tb


def _choose_nf_tiles(n: int, flat: int, itemsize: int, sub: int):
    """Fallback tiling on the logical (n, flat) view (total not a multiple of 128)."""
    if flat >= _LANE:
        max_tf = max(_LANE, (_MAX_BLOCK_BYTES // (sub * itemsize)) // _LANE * _LANE)
        tf = min((flat // _LANE) * _LANE, max_tf)   # no artificial 2048-lane cap
    else:
        tf = flat                                   # full dim -> legal block shape
    if n >= sub:
        max_tb = max(sub, _MAX_BLOCK_BYTES // (tf * itemsize))
        tb = max(sub, min(n // sub, max_tb // sub) * sub)
    else:
        tb = n                                      # full dim -> legal block shape
    return tb, tf


def view_flatten(x: jax.Array, use_pallas_copy: bool = False) -> jax.Array:
    """ViewFlatten.forward: (N, d1, d2, ...) -> (N, d1*d2*...).

    Default: free metadata-only reshape (recommended production path).
    use_pallas_copy=True routes the result through a lane-dense Pallas
    identity-copy kernel (only useful as a fusion scaffold).
    """
    n = x.shape[0]
    flat = 1
    for d in x.shape[1:]:
        flat *= d

    # Row-major flatten == torch .view on a contiguous tensor. Free in XLA.
    x2 = jnp.reshape(x, (n, flat))
    if not use_pallas_copy:
        return x2

    itemsize = jnp.dtype(x.dtype).itemsize
    sub = _sublane_multiple(itemsize)
    total = n * flat
    cost = pl.CostEstimate(flops=0, transcendentals=0,
                           bytes_accessed=2 * total * itemsize)

    if total % _LANE == 0:
        # Dense contiguous slab: full (8,128)-aligned blocks, unmasked stores,
        # long contiguous DMA runs, 1-D "parallel" grid (shards across v7x TCs).
        rows, c, tb = _choose_slab(total, itemsize, sub)
        slab = jnp.reshape(x2, (rows, c))           # free (contiguous, row-major)
        out = pl.pallas_call(
            _copy_kernel,
            out_shape=jax.ShapeDtypeStruct((rows, c), x.dtype),
            grid=(pl.cdiv(rows, tb),),
            in_specs=[pl.BlockSpec((tb, c), lambda i: (i, 0))],
            out_specs=pl.BlockSpec((tb, c), lambda i: (i, 0)),
            compiler_params=pltpu.CompilerParams(
                dimension_semantics=("parallel",),
                vmem_limit_bytes=_VMEM_LIMIT_BYTES),
            cost_estimate=cost,
        )(slab)
        return jnp.reshape(out, (n, flat))          # free

    # Fallback: tile the logical (n, flat) view directly (edge blocks masked).
    tb, tf = _choose_nf_tiles(n, flat, itemsize, sub)
    return pl.pallas_call(
        _copy_kernel,
        out_shape=jax.ShapeDtypeStruct((n, flat), x.dtype),
        grid=(pl.cdiv(n, tb), pl.cdiv(flat, tf)),
        in_specs=[pl.BlockSpec((tb, tf), lambda i, j: (i, j))],
        out_specs=pl.BlockSpec((tb, tf), lambda i, j: (i, j)),
        compiler_params=pltpu.CompilerParams(
            dimension_semantics=("parallel", "parallel"),
            vmem_limit_bytes=_VMEM_LIMIT_BYTES),
        cost_estimate=cost,
    )(x2)


if __name__ == "__main__":
    # Small shapes consistent with a conv feature map: batch=2, channels=4, 16x16.
    key = jax.random.PRNGKey(0)
    x = jax.random.normal(key, (2, 4, 16, 16), dtype=jnp.float32)

    # Reference: plain reshape (== torch .view for a contiguous NCHW tensor).
    y_ref = x.reshape(x.shape[0], -1)

    # Recommended (default) production path: free metadata-only reshape.
    y_free = jax.block_until_ready(view_flatten(x))
    assert y_free.shape == (2, 4 * 16 * 16), y_free.shape
    assert jnp.array_equal(y_free, y_ref)

    # Pallas fusion-scaffold path: dense-slab identity copy, exercised once.
    y_pal = jax.block_until_ready(view_flatten(x, use_pallas_copy=True))
    assert y_pal.shape == (2, 4 * 16 * 16), y_pal.shape
    assert y_pal.dtype == x.dtype
    assert jnp.array_equal(y_pal, y_ref), "mismatch vs reference flatten"

    print("KERNEL_OK")
</pallas_src>

<mosaic_0001>
module attributes {stable_mosaic.version = 11 : i64} {
  func.func @_copy_kernel(%arg0: i32, %arg1: memref<1x2048xf32, #tpu.memory_space<vmem>>, %arg2: memref<1x2048xf32, #tpu.memory_space<vmem>>) attributes {dimension_semantics = [#tpu.dimension_semantics<parallel>], iteration_bounds = array<i64: 1>, scalar_prefetch = 0 : i64, scratch_operands = 0 : i64, tpu.core_type = #tpu.core_type<tc>, window_params = [{transform_indices = @transform_0, window_bounds = array<i64: 1, 2048>}, {transform_indices = @transform_1, window_bounds = array<i64: 1, 2048>}]} {
    %c0 = arith.constant 0 : index
    %c0_0 = arith.constant 0 : index
    %0 = vector.load %arg1[%c0, %c0_0] : memref<1x2048xf32, #tpu.memory_space<vmem>>, vector<1x2048xf32>
    %c0_1 = arith.constant 0 : index
    %c0_2 = arith.constant 0 : index
    %1 = vector.load %arg2[%c0_1, %c0_2] : memref<1x2048xf32, #tpu.memory_space<vmem>>, vector<1x2048xf32>
    tpu.vector_store %arg2[%c0_1, %c0_2], %0 {strides = array<i32>} : memref<1x2048xf32, #tpu.memory_space<vmem>>, vector<1x2048xf32>,
    return
  }
  func.func @transform_0(%arg0: i32) -> (i32, i32) {
    %c0_i32 = arith.constant 0 : i32
    %c0_i32_0 = arith.constant 0 : i32
    return %arg0, %c0_i32 : i32, i32
  }
  func.func @transform_1(%arg0: i32) -> (i32, i32) {
    %c0_i32 = arith.constant 0 : i32
    %c0_i32_0 = arith.constant 0 : i32
    return %arg0, %c0_i32 : i32, i32
  }
}

</mosaic_0001>

<llo_original>
// kernel: tpu_custom_call.1
$region0: #{tpu_custom_call.1}
  #allocation0 [shape = 'u32[]', space=smem, size = 0x4, offset = 0x4, fixed_abs, tag = 'smem constant byte address 0x4 - core index']
  #allocation1 [shape = 'u32[144,128]{1,0:T(1,128)}', space=vmem, size = 0x12000, scoped, tag = 'internal scratch']
  %s0 = inlined_call_operand.hbm [shape: f32[1,2048], index: 0, kind: input, shape index: {}]
  %s1 = inlined_call_operand.hbm [shape: f32[1,2048], index: 1, kind: output, shape index: {}]
  %s2 = sld [smem:[#allocation0]]
  $region18: #{tpu_custom_call.1} parent=0
    _
  %s4 = ssub.s32 1, %s2
  %s5 = scalar_select 0, %s4, %s2
  $region1: #{tpu_custom_call.1} parent=0
    #allocation2 [shape = 'u8[8192]{0}', space=vmem, size = 0x2000, scoped, tag = 'input window, operand 0, single buffered']
    #allocation3 [shape = 's32[1]{0}', space=sflag, size = 0x4, scoped, tag = 'scoped memory for tpu_custom_call.1']
    #allocation4 [shape = 's32[1]{0}', space=sflag, size = 0x4, scoped, tag = 'scoped memory for tpu_custom_call.1']
    #allocation5 [shape = 'u8[8192]{0}', space=vmem, size = 0x2000, scoped, tag = 'output window, operand 0, single buffered']
    %6 = vsyncpa [#allocation3], 0
    %7 = vsyncpa [#allocation4], 0
    // Predicated region
    $region2: #{tpu_custom_call.1} parent=1 // pred_check
      _
    $region3: #{tpu_custom_call.1} parent=1 // pred_check_branch
      %9 = sbr.rel (0) target = $region5
    $region4: #{tpu_custom_call.1} parent=1 // pred_region
      %s11 = ssub.s32 256, 256
      %12 = vsyncadd [#allocation3], %s11
      %s14 = sshll.u32 [#allocation2], 4
      %s15 = int_to_ptr.vmem [resolvable:$true] %s14
      %17 = dma.hbm_to_vmem [thread:$0]  %s0, 256, %s15, [#allocation3]
    $region5: #{tpu_custom_call.1} parent=1 // pred_fallthru
      _
    // Predicated region
    $region6: #{tpu_custom_call.1} parent=1 // pred_check
      _
    $region7: #{tpu_custom_call.1} parent=1 // pred_check_branch
      %19 = sbr.rel (0) target = $region9
    $region8: #{tpu_custom_call.1} parent=1 // pred_region
      %20 = dma.done [#allocation3], 256
    $region9: #{tpu_custom_call.1} parent=1 // pred_fallthru
      _
    %v21 = vld [vmem:[#allocation2] sm:$0xff]
    %v22 = vld [vmem:[#allocation2 + $0x8] sm:$0xff]
    %23 = vst [vmem:[#allocation5] sm:$0xff] %v21
    %24 = vst [vmem:[#allocation5 + $0x8] sm:$0xff] %v22
    // Predicated region
    $region10: #{tpu_custom_call.1} parent=1 // pred_check
      _
    $region11: #{tpu_custom_call.1} parent=1 // pred_check_branch
      %26 = sbr.rel (0) target = $region13
    $region12: #{tpu_custom_call.1} parent=1 // pred_region
      %s28 = ssub.s32 256, 256
      %29 = vsyncadd [#allocation4], %s28
      %s31 = sshll.u32 [#allocation5], 4
      %s32 = int_to_ptr.vmem [resolvable:$true] %s31
      %34 = dma.vmem_to_hbm [thread:$0]  %s32, 256, %s1, [#allocation4]
    $region13: #{tpu_custom_call.1} parent=1 // pred_fallthru
      _
    // Predicated region
    $region14: #{tpu_custom_call.1} parent=1 // pred_check
      _
    $region15: #{tpu_custom_call.1} parent=1 // pred_check_branch
      %36 = sbr.rel (0) target = $region17
    $region16: #{tpu_custom_call.1} parent=1 // pred_region
      %37 = dma.done [#allocation4], 256
    $region17: #{tpu_custom_call.1} parent=1 // pred_fallthru
      _
    %38 = vsyncpa [#allocation3], 1
    %39 = vsyncpa [#allocation4], 1

</llo_original>
